<compile_context>
chip_gen: v5e
topology: v5e:2x2
jax: 0.10.0
libtpu: 0.0.40
codegen_flags: <defaults>
</compile_context>

<pallas_src>
import functools

import jax
import jax.numpy as jnp
from jax import lax
from jax.experimental import pallas as pl
from jax.experimental.pallas import tpu as pltpu

LN_EPS = 1e-5  # torch.nn.LayerNorm default


def _round_up(x, m):
    return ((x + m - 1) // m) * m


def _cdiv(a, b):
    return (a + b - 1) // b


# ----------------------------------------------------------------------------
# Kernel
# ----------------------------------------------------------------------------
def decoder_res_kernel(x_ref, w1_ref, b1_ref, g_ref, beta_ref, w2_ref, b2_ref,
                       o_ref, *, h_real, h_pad):
    # One row tile of tokens; all lane-padded weights are VMEM-resident.
    x_in = x_ref[...]                                   # (tm, Hp) f32 or bf16
    x_f32 = x_in.astype(jnp.float32)
    x_bf16 = x_in.astype(jnp.bfloat16)

    # --- Linear 1 on the MXU (bf16 operands, f32 accumulation) ---
    h = jnp.dot(x_bf16, w1_ref[...], preferred_element_type=jnp.float32)
    h = h + b1_ref[...]                                 # padded cols stay 0

    # --- LayerNorm over the *real* hidden width, centered variance ---
    inv_h = jnp.float32(1.0 / h_real)
    mu = jnp.sum(h, axis=-1, keepdims=True) * inv_h
    d = h - mu
    if h_pad != h_real:
        # Padded columns of h are exactly 0, so d there equals -mu; mask them
        # out of the variance so stats match the unpadded reference.
        col = lax.broadcasted_iota(jnp.int32, (1, h_pad), 1)
        dv = jnp.where(col < h_real, d, 0.0)
    else:
        dv = d
    var = jnp.sum(dv * dv, axis=-1, keepdims=True) * inv_h
    hn = d * lax.rsqrt(var + LN_EPS)
    hn = hn * g_ref[...] + beta_ref[...]                # gamma/beta padded w/ 0
    hn = jnp.maximum(hn, 0.0)                           # ReLU

    # --- residual + final projection (MXU) ---
    z = x_f32 + hn                                      # padded cols stay 0
    out = jnp.dot(z.astype(jnp.bfloat16), w2_ref[...],
                  preferred_element_type=jnp.float32)
    o_ref[...] = (out + b2_ref[...]).astype(o_ref.dtype)


# ----------------------------------------------------------------------------
# One-time parameter preparation (padding + bf16 cast, done at init)
# ----------------------------------------------------------------------------
def prepare_decoder_res_params(w1, b1, gamma, beta, w2, b2):
    """Pad params to lane-dense (multiple-of-128) shapes; weights -> bf16.

    Done once so the per-call path never re-reads/re-writes weights via HBM.
    """
    H = w1.shape[0]
    O = w2.shape[1]
    Hp = _round_up(H, 128)
    Op = _round_up(O, 128)
    f32, bf16 = jnp.float32, jnp.bfloat16

    def pad2(a, shape, dtype):
        return jnp.zeros(shape, dtype).at[:a.shape[0], :a.shape[1]].set(
            a.astype(dtype))

    return {
        "w1": pad2(w1, (Hp, Hp), bf16),
        "w2": pad2(w2, (Hp, Op), bf16),
        "b1": pad2(jnp.reshape(b1, (1, H)), (1, Hp), f32),
        "gamma": pad2(jnp.reshape(gamma, (1, H)), (1, Hp), f32),
        "beta": pad2(jnp.reshape(beta, (1, H)), (1, Hp), f32),
        "b2": pad2(jnp.reshape(b2, (1, O)), (1, Op), f32),
        "h_real": H,
        "out_real": O,
    }


# ----------------------------------------------------------------------------
# Generation-aware policy helpers
# ----------------------------------------------------------------------------
def _tpu_generation():
    try:
        kind = jax.devices()[0].device_kind.lower()
    except Exception:
        return None
    if "v7" in kind or "7x" in kind:
        return "v7"
    if "v6" in kind:
        return "v6"
    if "v5" in kind:
        return "v5"
    return None


def _vmem_capacity_bytes(gen):
    try:
        cap = getattr(pltpu.get_tpu_info(), "vmem_capacity_bytes", None)
        if cap:
            return int(cap)
    except Exception:
        pass
    return (64 << 20) if gen == "v7" else (128 << 20)


# ----------------------------------------------------------------------------
# pallas_call wrapper
# ----------------------------------------------------------------------------
@functools.partial(
    jax.jit,
    static_argnames=("h_real", "o_real", "tm", "grid", "single_buffer",
                     "vmem_cap"))
def _decoder_res_run(xk, w1, b1, gamma, beta, w2, b2, *, h_real, o_real, tm,
                     grid, single_buffer, vmem_cap):
    N, Hp = xk.shape
    Op = w2.shape[1]

    # VMEM budget: double-buffered x/out tiles + resident weights (+ headroom),
    # capped at ~85% of the generation's physical VMEM.
    wbuf = 1 if single_buffer else 2
    need = (2 * tm * Hp * xk.dtype.itemsize          # x tiles (double-buffered)
            + 2 * tm * Op * 4                        # out tiles (double-buffered)
            + wbuf * (Hp * Hp + Hp * Op) * 2         # bf16 weights
            + wbuf * (3 * Hp + Op) * 4)              # biases / gamma / beta
    vmem_limit = int(min(max(2 * need + (16 << 20), 32 << 20), vmem_cap))

    def const_spec(shape):
        idx = lambda i: (0, 0)
        if single_buffer:
            # Weights never change across the grid: one VMEM buffer is enough.
            return pl.BlockSpec(shape, idx, pipeline_mode=pl.Buffered(1))
        return pl.BlockSpec(shape, idx)

    flops = 2 * N * Hp * (Hp + Op)
    bytes_accessed = (xk.size * xk.dtype.itemsize
                      + (w1.size + w2.size) * 2
                      + (b1.size + gamma.size + beta.size + b2.size) * 4
                      + N * Op * 4)
    cost = pl.CostEstimate(flops=flops, transcendentals=N,
                           bytes_accessed=bytes_accessed)

    kernel = functools.partial(decoder_res_kernel, h_real=h_real, h_pad=Hp)

    out = pl.pallas_call(
        kernel,
        out_shape=jax.ShapeDtypeStruct((N, Op), jnp.float32),
        grid_spec=pltpu.PrefetchScalarGridSpec(
            num_scalar_prefetch=0,
            grid=grid,
            in_specs=[
                pl.BlockSpec((tm, Hp), lambda i: (i, 0)),   # x row tile
                const_spec((Hp, Hp)),                       # W1 (bf16)
                const_spec((1, Hp)),                        # b1
                const_spec((1, Hp)),                        # gamma
                const_spec((1, Hp)),                        # beta
                const_spec((Hp, Op)),                       # W2 (bf16)
                const_spec((1, Op)),                        # b2
            ],
            out_specs=pl.BlockSpec((tm, Op), lambda i: (i, 0)),
        ),
        compiler_params=pltpu.CompilerParams(
            dimension_semantics=("parallel",),
            vmem_limit_bytes=vmem_limit,
        ),
        cost_estimate=cost,
    )(xk, w1, b1, gamma, beta, w2, b2)

    return out[:, :o_real] if Op != o_real else out


def decoder_res(x, params, *, tm_max=None):
    """x: (N, H) float.  Returns (N, out_features) float32."""
    N, H = x.shape
    assert H == params["h_real"], "x hidden size does not match params"
    Hp = params["w1"].shape[0]
    O = params["out_real"]

    gen = _tpu_generation()
    if tm_max is None:
        tm_max = {"v5": 256, "v6": 512, "v7": 256}.get(gen, 256)

    # Balanced row tiles (multiple of 16 rows); on v7x force >= 2 grid steps
    # so both TensorCores get work via the "parallel" axis.
    min_tiles = 2 if (gen == "v7" and N >= 32) else 1
    n_tiles = max(_cdiv(N, tm_max), min_tiles)
    tm = min(_round_up(_cdiv(N, n_tiles), 16), _round_up(N, 16))
    grid = (_cdiv(N, tm),)

    # x: zero-copy when already lane-dense; otherwise one pad pass that also
    # casts to bf16 (halves the kernel's dominant HBM read stream).  The row
    # remainder is handled by a ragged last grid block, never a padded copy.
    if Hp == H:
        xk = x
    else:
        xk = jnp.zeros((N, Hp), jnp.bfloat16).at[:, :H].set(
            x.astype(jnp.bfloat16))

    vmem_cap = int(0.85 * _vmem_capacity_bytes(gen))

    run = functools.partial(
        _decoder_res_run, xk, params["w1"], params["b1"], params["gamma"],
        params["beta"], params["w2"], params["b2"],
        h_real=H, o_real=O, tm=tm, grid=grid, vmem_cap=vmem_cap)
    try:
        return run(single_buffer=True)
    except Exception:
        # Older JAX / Mosaic without single-buffered pipeline_mode support.
        return run(single_buffer=False)


# ----------------------------------------------------------------------------
# Pure-JAX reference
# ----------------------------------------------------------------------------
def decoder_res_ref(x, w1, b1, gamma, beta, w2, b2):
    h = x @ w1 + b1
    mu = h.mean(-1, keepdims=True)
    var = ((h - mu) ** 2).mean(-1, keepdims=True)
    h = (h - mu) / jnp.sqrt(var + LN_EPS) * gamma + beta
    h = jnp.maximum(h, 0.0)
    return (x + h) @ w2 + b2


if __name__ == "__main__":
    N, H, O = 16, 32, 60   # tokens, hidden_size, out_features

    key = jax.random.PRNGKey(0)
    kx, k1, k2, k3, k4 = jax.random.split(key, 5)

    x = jax.random.normal(kx, (N, H), dtype=jnp.float32)

    # Deterministic synthetic parameter init (not a checkpoint load).
    w1 = jax.random.normal(k1, (H, H), dtype=jnp.float32) * (1.0 / H ** 0.5)
    b1 = jax.random.normal(k2, (H,), dtype=jnp.float32) * 0.02
    gamma = jnp.ones((H,), dtype=jnp.float32)
    beta = jnp.zeros((H,), dtype=jnp.float32)
    w2 = jax.random.normal(k3, (H, O), dtype=jnp.float32) * (1.0 / H ** 0.5)
    b2 = jax.random.normal(k4, (O,), dtype=jnp.float32) * 0.02

    params = prepare_decoder_res_params(w1, b1, gamma, beta, w2, b2)

    out = decoder_res(x, params)
    out = jax.block_until_ready(out)

    ref = decoder_res_ref(x, w1, b1, gamma, beta, w2, b2)
    assert out.shape == (N, O)
    # bf16 matmul operands / bf16 x stream (f32 accumulation) -> loose tol.
    assert jnp.allclose(out, ref, atol=5e-2, rtol=5e-2), "mismatch vs reference"

    print("KERNEL_OK")
</pallas_src>

<mosaic_0001>
module attributes {stable_mosaic.version = 11 : i64} {
  func.func @decoder_res_kernel(%arg0: i32, %arg1: memref<16x128xbf16, #tpu.memory_space<vmem>>, %arg2: memref<128x128xbf16, #tpu.memory_space<vmem>>, %arg3: memref<1x128xf32, #tpu.memory_space<vmem>>, %arg4: memref<1x128xf32, #tpu.memory_space<vmem>>, %arg5: memref<1x128xf32, #tpu.memory_space<vmem>>, %arg6: memref<128x128xbf16, #tpu.memory_space<vmem>>, %arg7: memref<1x128xf32, #tpu.memory_space<vmem>>, %arg8: memref<16x128xf32, #tpu.memory_space<vmem>>) attributes {dimension_semantics = [#tpu.dimension_semantics<parallel>], iteration_bounds = array<i64: 1>, scalar_prefetch = 0 : i64, scratch_operands = 0 : i64, tpu.core_type = #tpu.core_type<tc>, window_params = [{transform_indices = @transform_0, window_bounds = array<i64: 16, 128>}, {pipeline_mode = #tpu.pipeline_mode<synchronous>, transform_indices = @transform_1, window_bounds = array<i64: 128, 128>}, {pipeline_mode = #tpu.pipeline_mode<synchronous>, transform_indices = @transform_2, window_bounds = array<i64: 1, 128>}, {pipeline_mode = #tpu.pipeline_mode<synchronous>, transform_indices = @transform_3, window_bounds = array<i64: 1, 128>}, {pipeline_mode = #tpu.pipeline_mode<synchronous>, transform_indices = @transform_4, window_bounds = array<i64: 1, 128>}, {pipeline_mode = #tpu.pipeline_mode<synchronous>, transform_indices = @transform_5, window_bounds = array<i64: 128, 128>}, {pipeline_mode = #tpu.pipeline_mode<synchronous>, transform_indices = @transform_6, window_bounds = array<i64: 1, 128>}, {transform_indices = @transform_7, window_bounds = array<i64: 16, 128>}]} {
    %c0 = arith.constant 0 : index
    %c0_0 = arith.constant 0 : index
    %0 = vector.load %arg1[%c0, %c0_0] : memref<16x128xbf16, #tpu.memory_space<vmem>>, vector<16x128xbf16>
    %1 = arith.extf %0 : vector<16x128xbf16> to vector<16x128xf32>
    %c0_1 = arith.constant 0 : index
    %c0_2 = arith.constant 0 : index
    %2 = vector.load %arg2[%c0_1, %c0_2] : memref<128x128xbf16, #tpu.memory_space<vmem>>, vector<128x128xbf16>
    %cst = arith.constant dense<0.000000e+00> : vector<16x128xf32>
    %3 = tpu.matmul %0, %2, %cst {dimension_numbers = #tpu.dot_dimension_numbers<[1], [0], [0], [1], [0, 0, 1, 1], [], []>} : vector<16x128xbf16>, vector<128x128xbf16>, vector<16x128xf32> -> vector<16x128xf32>
    %c0_3 = arith.constant 0 : index
    %c0_4 = arith.constant 0 : index
    %4 = vector.load %arg3[%c0_3, %c0_4] : memref<1x128xf32, #tpu.memory_space<vmem>>, vector<1x128xf32>
    %5 = vector.broadcast %4 : vector<1x128xf32> to vector<16x128xf32>
    %6 = arith.addf %3, %5 : vector<16x128xf32>
    %cst_5 = arith.constant dense<0.000000e+00> : vector<16xf32>
    %7 = vector.multi_reduction <add>, %6, %cst_5 [1] : vector<16x128xf32> to vector<16xf32>
    %8 = vector.shape_cast %7 : vector<16xf32> to vector<16x1xf32>
    %cst_6 = arith.constant 3.125000e-02 : f32
    %9 = vector.broadcast %cst_6 : f32 to vector<16x1xf32>
    %10 = arith.mulf %8, %9 : vector<16x1xf32>
    %11 = vector.broadcast %10 : vector<16x1xf32> to vector<16x128xf32>
    %12 = arith.subf %6, %11 : vector<16x128xf32>
    %13 = tpu.iota {dimensions = array<i32: 1>} : vector<1x128xi32>
    %c32_i32 = arith.constant 32 : i32
    %14 = vector.broadcast %c32_i32 : i32 to vector<1x128xi32>
    %15 = arith.cmpi slt, %13, %14 : vector<1x128xi32>
    %cst_7 = arith.constant 0.000000e+00 : f32
    %16 = vector.shape_cast %15 : vector<1x128xi1> to vector<1x128xi1>
    %17 = vector.broadcast %16 : vector<1x128xi1> to vector<16x128xi1>
    %18 = vector.broadcast %cst_7 : f32 to vector<16x128xf32>
    %19 = arith.select %17, %12, %18 : vector<16x128xi1>, vector<16x128xf32>
    %20 = arith.mulf %19, %19 : vector<16x128xf32>
    %cst_8 = arith.constant dense<0.000000e+00> : vector<16xf32>
    %21 = vector.multi_reduction <add>, %20, %cst_8 [1] : vector<16x128xf32> to vector<16xf32>
    %22 = vector.shape_cast %21 : vector<16xf32> to vector<16x1xf32>
    %cst_9 = arith.constant 3.125000e-02 : f32
    %23 = vector.broadcast %cst_9 : f32 to vector<16x1xf32>
    %24 = arith.mulf %22, %23 : vector<16x1xf32>
    %cst_10 = arith.constant 9.99999974E-6 : f32
    %25 = vector.broadcast %cst_10 : f32 to vector<16x1xf32>
    %26 = arith.addf %24, %25 : vector<16x1xf32>
    %27 = math.rsqrt %26 : vector<16x1xf32>
    %28 = vector.broadcast %27 : vector<16x1xf32> to vector<16x128xf32>
    %29 = arith.mulf %12, %28 : vector<16x128xf32>
    %c0_11 = arith.constant 0 : index
    %c0_12 = arith.constant 0 : index
    %30 = vector.load %arg4[%c0_11, %c0_12] : memref<1x128xf32, #tpu.memory_space<vmem>>, vector<1x128xf32>
    %31 = vector.broadcast %30 : vector<1x128xf32> to vector<16x128xf32>
    %32 = arith.mulf %29, %31 : vector<16x128xf32>
    %c0_13 = arith.constant 0 : index
    %c0_14 = arith.constant 0 : index
    %33 = vector.load %arg5[%c0_13, %c0_14] : memref<1x128xf32, #tpu.memory_space<vmem>>, vector<1x128xf32>
    %34 = vector.broadcast %33 : vector<1x128xf32> to vector<16x128xf32>
    %35 = arith.addf %32, %34 : vector<16x128xf32>
    %cst_15 = arith.constant 0.000000e+00 : f32
    %36 = vector.broadcast %cst_15 : f32 to vector<16x128xf32>
    %37 = arith.maximumf %35, %36 : vector<16x128xf32>
    %38 = arith.addf %1, %37 : vector<16x128xf32>
    %39 = arith.truncf %38 : vector<16x128xf32> to vector<16x128xbf16>
    %c0_16 = arith.constant 0 : index
    %c0_17 = arith.constant 0 : index
    %40 = vector.load %arg6[%c0_16, %c0_17] : memref<128x128xbf16, #tpu.memory_space<vmem>>, vector<128x128xbf16>
    %cst_18 = arith.constant dense<0.000000e+00> : vector<16x128xf32>
    %41 = tpu.matmul %39, %40, %cst_18 {dimension_numbers = #tpu.dot_dimension_numbers<[1], [0], [0], [1], [0, 0, 1, 1], [], []>} : vector<16x128xbf16>, vector<128x128xbf16>, vector<16x128xf32> -> vector<16x128xf32>
    %c0_19 = arith.constant 0 : index
    %c0_20 = arith.constant 0 : index
    %42 = vector.load %arg7[%c0_19, %c0_20] : memref<1x128xf32, #tpu.memory_space<vmem>>, vector<1x128xf32>
    %43 = vector.broadcast %42 : vector<1x128xf32> to vector<16x128xf32>
    %44 = arith.addf %41, %43 : vector<16x128xf32>
    %c0_21 = arith.constant 0 : index
    %c0_22 = arith.constant 0 : index
    %45 = vector.load %arg8[%c0_21, %c0_22] : memref<16x128xf32, #tpu.memory_space<vmem>>, vector<16x128xf32>
    tpu.vector_store %arg8[%c0_21, %c0_22], %44 {strides = array<i32>} : memref<16x128xf32, #tpu.memory_space<vmem>>, vector<16x128xf32>,
    return
  }
  func.func @transform_0(%arg0: i32) -> (i32, i32) {
    %c0_i32 = arith.constant 0 : i32
    %c0_i32_0 = arith.constant 0 : i32
    return %arg0, %c0_i32 : i32, i32
  }
  func.func @transform_1(%arg0: i32) -> (i32, i32) {
    %c0_i32 = arith.constant 0 : i32
    %c0_i32_0 = arith.constant 0 : i32
    %c0_i32_1 = arith.constant 0 : i32
    return %c0_i32, %c0_i32_0 : i32, i32
  }
  func.func @transform_2(%arg0: i32) -> (i32, i32) {
    %c0_i32 = arith.constant 0 : i32
    %c0_i32_0 = arith.constant 0 : i32
    %c0_i32_1 = arith.constant 0 : i32
    return %c0_i32, %c0_i32_0 : i32, i32
  }
  func.func @transform_3(%arg0: i32) -> (i32, i32) {
    %c0_i32 = arith.constant 0 : i32
    %c0_i32_0 = arith.constant 0 : i32
    %c0_i32_1 = arith.constant 0 : i32
    return %c0_i32, %c0_i32_0 : i32, i32
  }
  func.func @transform_4(%arg0: i32) -> (i32, i32) {
    %c0_i32 = arith.constant 0 : i32
    %c0_i32_0 = arith.constant 0 : i32
    %c0_i32_1 = arith.constant 0 : i32
    return %c0_i32, %c0_i32_0 : i32, i32
  }
  func.func @transform_5(%arg0: i32) -> (i32, i32) {
    %c0_i32 = arith.constant 0 : i32
    %c0_i32_0 = arith.constant 0 : i32
    %c0_i32_1 = arith.constant 0 : i32
    return %c0_i32, %c0_i32_0 : i32, i32
  }
  func.func @transform_6(%arg0: i32) -> (i32, i32) {
    %c0_i32 = arith.constant 0 : i32
    %c0_i32_0 = arith.constant 0 : i32
    %c0_i32_1 = arith.constant 0 : i32
    return %c0_i32, %c0_i32_0 : i32, i32
  }
  func.func @transform_7(%arg0: i32) -> (i32, i32) {
    %c0_i32 = arith.constant 0 : i32
    %c0_i32_0 = arith.constant 0 : i32
    return %arg0, %c0_i32 : i32, i32
  }
}

module attributes {stable_mosaic.version = 11 : i64} {
  func.func @decoder_res_kernel(%arg0: i32, %arg1: memref<16x128xbf16, #tpu.memory_space<vmem>>, %arg2: memref<128x128xbf16, #tpu.memory_space<vmem>>, %arg3: memref<1x128xf32, #tpu.memory_space<vmem>>, %arg4: memref<1x128xf32, #tpu.memory_space<vmem>>, %arg5: memref<1x128xf32, #tpu.memory_space<vmem>>, %arg6: memref<128x128xbf16, #tpu.memory_space<vmem>>, %arg7: memref<1x128xf32, #tpu.memory_space<vmem>>, %arg8: memref<16x128xf32, #tpu.memory_space<vmem>>) attributes {dimension_semantics = [#tpu.dimension_semantics<parallel>], iteration_bounds = array<i64: 1>, scalar_prefetch = 0 : i64, scratch_operands = 0 : i64, tpu.core_type = #tpu.core_type<tc>, window_params = [{transform_indices = @transform_0, window_bounds = array<i64: 16, 128>}, {pipeline_mode = #tpu.pipeline_mode<synchronous>, transform_indices = @transform_1, window_bounds = array<i64: 128, 128>}, {pipeline_mode = #tpu.pipeline_mode<synchronous>, transform_indices = @transform_2, window_bounds = array<i64: 1, 128>}, {pipeline_mode = #tpu.pipeline_mode<synchronous>, transform_indices = @transform_3, window_bounds = array<i64: 1, 128>}, {pipeline_mode = #tpu.pipeline_mode<synchronous>, transform_indices = @transform_4, window_bounds = array<i64: 1, 128>}, {pipeline_mode = #tpu.pipeline_mode<synchronous>, transform_indices = @transform_5, window_bounds = array<i64: 128, 128>}, {pipeline_mode = #tpu.pipeline_mode<synchronous>, transform_indices = @transform_6, window_bounds = array<i64: 1, 128>}, {transform_indices = @transform_7, window_bounds = array<i64: 16, 128>}]} {
    %c0 = arith.constant 0 : index
    %c0_0 = arith.constant 0 : index
    %0 = vector.load %arg1[%c0, %c0_0] : memref<16x128xbf16, #tpu.memory_space<vmem>>, vector<16x128xbf16>
    %1 = arith.extf %0 : vector<16x128xbf16> to vector<16x128xf32>
    %c0_1 = arith.constant 0 : index
    %c0_2 = arith.constant 0 : index
    %2 = vector.load %arg2[%c0_1, %c0_2] : memref<128x128xbf16, #tpu.memory_space<vmem>>, vector<128x128xbf16>
    %cst = arith.constant dense<0.000000e+00> : vector<16x128xf32>
    %3 = tpu.matmul %0, %2, %cst {dimension_numbers = #tpu.dot_dimension_numbers<[1], [0], [0], [1], [0, 0, 1, 1], [], []>} : vector<16x128xbf16>, vector<128x128xbf16>, vector<16x128xf32> -> vector<16x128xf32>
    %c0_3 = arith.constant 0 : index
    %c0_4 = arith.constant 0 : index
    %4 = vector.load %arg3[%c0_3, %c0_4] : memref<1x128xf32, #tpu.memory_space<vmem>>, vector<1x128xf32>
    %5 = vector.broadcast %4 : vector<1x128xf32> to vector<16x128xf32>
    %6 = arith.addf %3, %5 : vector<16x128xf32>
    %cst_5 = arith.constant dense<0.000000e+00> : vector<16xf32>
    %7 = vector.multi_reduction <add>, %6, %cst_5 [1] : vector<16x128xf32> to vector<16xf32>
    %8 = vector.shape_cast %7 : vector<16xf32> to vector<16x1xf32>
    %cst_6 = arith.constant 3.125000e-02 : f32
    %9 = vector.broadcast %cst_6 : f32 to vector<16x1xf32>
    %10 = arith.mulf %8, %9 : vector<16x1xf32>
    %11 = vector.broadcast %10 : vector<16x1xf32> to vector<16x128xf32>
    %12 = arith.subf %6, %11 : vector<16x128xf32>
    %13 = tpu.iota {dimensions = array<i32: 1>} : vector<1x128xi32>
    %c32_i32 = arith.constant 32 : i32
    %14 = vector.broadcast %c32_i32 : i32 to vector<1x128xi32>
    %15 = arith.cmpi slt, %13, %14 : vector<1x128xi32>
    %cst_7 = arith.constant 0.000000e+00 : f32
    %16 = vector.shape_cast %15 : vector<1x128xi1> to vector<1x128xi1>
    %17 = vector.broadcast %16 : vector<1x128xi1> to vector<16x128xi1>
    %18 = vector.broadcast %cst_7 : f32 to vector<16x128xf32>
    %19 = arith.select %17, %12, %18 : vector<16x128xi1>, vector<16x128xf32>
    %20 = arith.mulf %19, %19 : vector<16x128xf32>
    %cst_8 = arith.constant dense<0.000000e+00> : vector<16xf32>
    %21 = vector.multi_reduction <add>, %20, %cst_8 [1] : vector<16x128xf32> to vector<16xf32>
    %22 = vector.shape_cast %21 : vector<16xf32> to vector<16x1xf32>
    %cst_9 = arith.constant 3.125000e-02 : f32
    %23 = vector.broadcast %cst_9 : f32 to vector<16x1xf32>
    %24 = arith.mulf %22, %23 : vector<16x1xf32>
    %cst_10 = arith.constant 9.99999974E-6 : f32
    %25 = vector.broadcast %cst_10 : f32 to vector<16x1xf32>
    %26 = arith.addf %24, %25 : vector<16x1xf32>
    %27 = math.rsqrt %26 : vector<16x1xf32>
    %28 = vector.broadcast %27 : vector<16x1xf32> to vector<16x128xf32>
    %29 = arith.mulf %12, %28 : vector<16x128xf32>
    %c0_11 = arith.constant 0 : index
    %c0_12 = arith.constant 0 : index
    %30 = vector.load %arg4[%c0_11, %c0_12] : memref<1x128xf32, #tpu.memory_space<vmem>>, vector<1x128xf32>
    %31 = vector.broadcast %30 : vector<1x128xf32> to vector<16x128xf32>
    %32 = arith.mulf %29, %31 : vector<16x128xf32>
    %c0_13 = arith.constant 0 : index
    %c0_14 = arith.constant 0 : index
    %33 = vector.load %arg5[%c0_13, %c0_14] : memref<1x128xf32, #tpu.memory_space<vmem>>, vector<1x128xf32>
    %34 = vector.broadcast %33 : vector<1x128xf32> to vector<16x128xf32>
    %35 = arith.addf %32, %34 : vector<16x128xf32>
    %cst_15 = arith.constant 0.000000e+00 : f32
    %36 = vector.broadcast %cst_15 : f32 to vector<16x128xf32>
    %37 = arith.maximumf %35, %36 : vector<16x128xf32>
    %38 = arith.addf %1, %37 : vector<16x128xf32>
    %39 = arith.truncf %38 : vector<16x128xf32> to vector<16x128xbf16>
    %c0_16 = arith.constant 0 : index
    %c0_17 = arith.constant 0 : index
    %40 = vector.load %arg6[%c0_16, %c0_17] : memref<128x128xbf16, #tpu.memory_space<vmem>>, vector<128x128xbf16>
    %cst_18 = arith.constant dense<0.000000e+00> : vector<16x128xf32>
    %41 = tpu.matmul %39, %40, %cst_18 {dimension_numbers = #tpu.dot_dimension_numbers<[1], [0], [0], [1], [0, 0, 1, 1], [], []>} : vector<16x128xbf16>, vector<128x128xbf16>, vector<16x128xf32> -> vector<16x128xf32>
    %c0_19 = arith.constant 0 : index
    %c0_20 = arith.constant 0 : index
    %42 = vector.load %arg7[%c0_19, %c0_20] : memref<1x128xf32, #tpu.memory_space<vmem>>, vector<1x128xf32>
    %43 = vector.broadcast %42 : vector<1x128xf32> to vector<16x128xf32>
    %44 = arith.addf %41, %43 : vector<16x128xf32>
    %c0_21 = arith.constant 0 : index
    %c0_22 = arith.constant 0 : index
    %45 = vector.load %arg8[%c0_21, %c0_22] : memref<16x128xf32, #tpu.memory_space<vmem>>, vector<16x128xf32>
    tpu.vector_store %arg8[%c0_21, %c0_22], %44 {strides = array<i32>} : memref<16x128xf32, #tpu.memory_space<vmem>>, vector<16x128xf32>,
    return
  }
  func.func @transform_0(%arg0: i32) -> (i32, i32) {
    %c0_i32 = arith.constant 0 : i32
    %c0_i32_0 = arith.constant 0 : i32
    return %arg0, %c0_i32 : i32, i32
  }
  func.func @transform_1(%arg0: i32) -> (i32, i32) {
    %c0_i32 = arith.constant 0 : i32
    %c0_i32_0 = arith.constant 0 : i32
    %c0_i32_1 = arith.constant 0 : i32
    return %c0_i32, %c0_i32_0 : i32, i32
  }
  func.func @transform_2(%arg0: i32) -> (i32, i32) {
    %c0_i32 = arith.constant 0 : i32
    %c0_i32_0 = arith.constant 0 : i32
    %c0_i32_1 = arith.constant 0 : i32
    return %c0_i32, %c0_i32_0 : i32, i32
  }
  func.func @transform_3(%arg0: i32) -> (i32, i32) {
    %c0_i32 = arith.constant 0 : i32
    %c0_i32_0 = arith.constant 0 : i32
    %c0_i32_1 = arith.constant 0 : i32
    return %c0_i32, %c0_i32_0 : i32, i32
  }
  func.func @transform_4(%arg0: i32) -> (i32, i32) {
    %c0_i32 = arith.constant 0 : i32
    %c0_i32_0 = arith.constant 0 : i32
    %c0_i32_1 = arith.constant 0 : i32
    return %c0_i32, %c0_i32_0 : i32, i32
  }
  func.func @transform_5(%arg0: i32) -> (i32, i32) {
    %c0_i32 = arith.constant 0 : i32
    %c0_i32_0 = arith.constant 0 : i32
    %c0_i32_1 = arith.constant 0 : i32
    return %c0_i32, %c0_i32_0 : i32, i32
  }
  func.func @transform_6(%arg0: i32) -> (i32, i32) {
    %c0_i32 = arith.constant 0 : i32
    %c0_i32_0 = arith.constant 0 : i32
    %c0_i32_1 = arith.constant 0 : i32
    return %c0_i32, %c0_i32_0 : i32, i32
  }
  func.func @transform_7(%arg0: i32) -> (i32, i32) {
    %c0_i32 = arith.constant 0 : i32
    %c0_i32_0 = arith.constant 0 : i32
    return %arg0, %c0_i32 : i32, i32
  }
}

</mosaic_0001>

<llo_original>
// kernel: _decoder_res_run.1
$region0: #{_decoder_res_run.1}
  #allocation0 [shape = 'u32[]', space=smem, size = 0x4, offset = 0x4, fixed_abs, tag = 'smem constant byte address 0x4 - core index']
  #allocation1 [shape = 'u32[72,128]{1,0:T(1,128)}', space=vmem, size = 0x9000, scoped, tag = 'internal scratch']
  %s0 = inlined_call_operand.hbm [shape: bf16[16,128], index: 0, kind: input, shape index: {}]
  %s1 = inlined_call_operand.hbm [shape: bf16[128,128], index: 1, kind: input, shape index: {}]
  %s2 = inlined_call_operand.vmem [shape: f32[1,128], index: 2, kind: input, shape index: {}]
  %s3 = inlined_call_operand.vmem [shape: f32[1,128], index: 3, kind: input, shape index: {}]
  %s4 = inlined_call_operand.vmem [shape: f32[1,128], index: 4, kind: input, shape index: {}]
  %s5 = inlined_call_operand.hbm [shape: bf16[128,128], index: 5, kind: input, shape index: {}]
  %s6 = inlined_call_operand.vmem [shape: f32[1,128], index: 6, kind: input, shape index: {}]
  %s7 = inlined_call_operand.hbm [shape: f32[16,128], index: 7, kind: output, shape index: {}]
  %s8 = sld [smem:[#allocation0]]
  $region50: #{_decoder_res_run.1} parent=0
    _
  %s10 = ssub.s32 1, %s8
  %s11 = scalar_select 0, %s10, %s8
  $region1: #{_decoder_res_run.1} parent=0
    #allocation2 [shape = 'u8[4096]{0}', space=vmem, size = 0x1000, scoped, tag = 'input window, operand 0, single buffered']
    #allocation3 [shape = 's32[1]{0}', space=sflag, size = 0x4, scoped, tag = 'scoped memory for _decoder_res_run.1']
    #allocation4 [shape = 's32[1]{0}', space=sflag, size = 0x4, scoped, tag = 'scoped memory for _decoder_res_run.1']
    #allocation5 [shape = 'u8[32768]{0}', space=vmem, size = 0x8000, scoped, tag = 'input window, operand 1, single buffered']
    #allocation6 [shape = 's32[1]{0}', space=sflag, size = 0x4, scoped, tag = 'scoped memory for _decoder_res_run.1']
    #allocation7 [shape = 'u8[32768]{0}', space=vmem, size = 0x8000, scoped, tag = 'input window, operand 5, single buffered']
    #allocation8 [shape = 'u8[8192]{0}', space=vmem, size = 0x2000, scoped, tag = 'output window, operand 0, single buffered']
    %12 = vsyncpa [#allocation3], 0
    %13 = vsyncpa [#allocation6], 0
    %14 = vsyncpa [#allocation4], 0
    // Predicated region
    $region2: #{_decoder_res_run.1} parent=1 // pred_check
      _
    $region3: #{_decoder_res_run.1} parent=1 // pred_check_branch
      %16 = sbr.rel (0) target = $region5
    $region4: #{_decoder_res_run.1} parent=1 // pred_region
      %18 = vsyncadd [#allocation3], 0
      %s19 = sshll.u32 %s0, 4
      %s20 = int_to_ptr.hbm [resolvable:$true] %s19
      %s21 = sshll.u32 [#allocation2], 4
      %s22 = int_to_ptr.vmem [resolvable:$true] %s21
      %27 = dma.hbm_to_vmem [thread:$0]  %s20, 128, %s22, [#allocation3], 64, 64, 4
    $region5: #{_decoder_res_run.1} parent=1 // pred_fallthru
      _
    // Predicated region
    $region6: #{_decoder_res_run.1} parent=1 // pred_check
      _
    $region7: #{_decoder_res_run.1} parent=1 // pred_check_branch
      %29 = sbr.rel (0) target = $region9
    $region8: #{_decoder_res_run.1} parent=1 // pred_region
      %31 = vsyncadd [#allocation6], 0
      %s32 = sshll.u32 %s1, 4
      %s33 = int_to_ptr.hbm [resolvable:$true] %s32
      %s34 = sshll.u32 [#allocation5], 4
      %s35 = int_to_ptr.vmem [resolvable:$true] %s34
      %40 = dma.hbm_to_vmem [thread:$0]  %s33, 1024, %s35, [#allocation6], 64, 64, 4
    $region9: #{_decoder_res_run.1} parent=1 // pred_fallthru
      _
    // Predicated region
    $region10: #{_decoder_res_run.1} parent=1 // pred_check
      _
    $region11: #{_decoder_res_run.1} parent=1 // pred_check_branch
      %42 = sbr.rel (0) target = $region13
    $region12: #{_decoder_res_run.1} parent=1 // pred_region
      _
    $region13: #{_decoder_res_run.1} parent=1 // pred_fallthru
      _
    // Predicated region
    $region14: #{_decoder_res_run.1} parent=1 // pred_check
      _
    $region15: #{_decoder_res_run.1} parent=1 // pred_check_branch
      %44 = sbr.rel (0) target = $region17
    $region16: #{_decoder_res_run.1} parent=1 // pred_region
      _
    $region17: #{_decoder_res_run.1} parent=1 // pred_fallthru
      _
    // Predicated region
    $region18: #{_decoder_res_run.1} parent=1 // pred_check
      _
    $region19: #{_decoder_res_run.1} parent=1 // pred_check_branch
      %46 = sbr.rel (0) target = $region21
    $region20: #{_decoder_res_run.1} parent=1 // pred_region
      _
    $region21: #{_decoder_res_run.1} parent=1 // pred_fallthru
      _
    // Predicated region
    $region22: #{_decoder_res_run.1} parent=1 // pred_check
      _
    $region23: #{_decoder_res_run.1} parent=1 // pred_check_branch
      %48 = sbr.rel (0) target = $region25
    $region24: #{_decoder_res_run.1} parent=1 // pred_region
      %50 = vsyncadd [#allocation6], 0
      %s51 = sshll.u32 %s5, 4
      %s52 = int_to_ptr.hbm [resolvable:$true] %s51
      %s53 = sshll.u32 [#allocation7], 4
      %s54 = int_to_ptr.vmem [resolvable:$true] %s53
      %59 = dma.hbm_to_vmem [thread:$0]  %s52, 1024, %s54, [#allocation6], 64, 64, 4
    $region25: #{_decoder_res_run.1} parent=1 // pred_fallthru
      _
    // Predicated region
    $region26: #{_decoder_res_run.1} parent=1 // pred_check
      _
    $region27: #{_decoder_res_run.1} parent=1 // pred_check_branch
      %61 = sbr.rel (0) target = $region29
    $region28: #{_decoder_res_run.1} parent=1 // pred_region
      _
    $region29: #{_decoder_res_run.1} parent=1 // pred_fallthru
      _
    // Predicated region
    $region30: #{_decoder_res_run.1} parent=1 // pred_check
      _
    $region31: #{_decoder_res_run.1} parent=1 // pred_check_branch
      %63 = sbr.rel (0) target = $region33
    $region32: #{_decoder_res_run.1} parent=1 // pred_region
      %65 = dma.done [#allocation3], 128
    $region33: #{_decoder_res_run.1} parent=1 // pred_fallthru
      _
    // Predicated region
    $region34: #{_decoder_res_run.1} parent=1 // pred_check
      _
    $region35: #{_decoder_res_run.1} parent=1 // pred_check_branch
      %67 = sbr.rel (0) target = $region37
    $region36: #{_decoder_res_run.1} parent=1 // pred_region
      %69 = dma.done [#allocation6], 1024
    $region37: #{_decoder_res_run.1} parent=1 // pred_fallthru
      _
    // Predicated region
    $region38: #{_decoder_res_run.1} parent=1 // pred_check
      _
    $region39: #{_decoder_res_run.1} parent=1 // pred_check_branch
      %71 = sbr.rel (0) target = $region41
    $region40: #{_decoder_res_run.1} parent=1 // pred_region
      %73 = dma.done [#allocation6], 1024
    $region41: #{_decoder_res_run.1} parent=1 // pred_fallthru
      _
    %v74 = vld [vmem:[#allocation2] sm:$0xf]
    %v75 = vld [vmem:[#allocation2 + $0x4] sm:$0xf]
    %v76 = vunpack.c.l.bf16 %v74
    %v77 = vunpack.c.l.bf16 %v75
    %v78 = vld [vmem:[#allocation5] sm:$0xf]
    %v79 = vld [vmem:[#allocation5 + $0x4] sm:$0xf]
    %v80 = vld [vmem:[#allocation5 + $0x8] sm:$0xf]
    %v81 = vld [vmem:[#allocation5 + $0xc] sm:$0xf]
    %v82 = vld [vmem:[#allocation5 + $0x10] sm:$0xf]
    %v83 = vld [vmem:[#allocation5 + $0x14] sm:$0xf]
    %v84 = vld [vmem:[#allocation5 + $0x18] sm:$0xf]
    %v85 = vld [vmem:[#allocation5 + $0x1c] sm:$0xf]
    %v86 = vld [vmem:[#allocation5 + $0x20] sm:$0xf]
    %v87 = vld [vmem:[#allocation5 + $0x24] sm:$0xf]
    %v88 = vld [vmem:[#allocation5 + $0x28] sm:$0xf]
    %v89 = vld [vmem:[#allocation5 + $0x2c] sm:$0xf]
    %v90 = vld [vmem:[#allocation5 + $0x30] sm:$0xf]
    %v91 = vld [vmem:[#allocation5 + $0x34] sm:$0xf]
    %v92 = vld [vmem:[#allocation5 + $0x38] sm:$0xf]
    %v93 = vld [vmem:[#allocation5 + $0x3c] sm:$0xf]
    %v94 = vld [vmem:[%s2] sm:$0x1]
    %v96 = vperm.slane %v94, 0
    %v100 = vunpack.c.l.b16 %v74
    %v101 = vunpack.c.l.b16 %v75
    %v102 = vpack.c.b16 %v101, %v100
    %v120 = vunpack.c.l.b16 %v78
    %v121 = vunpack.c.l.b16 %v79
    %v122 = vunpack.c.l.b16 %v80
    %v123 = vunpack.c.l.b16 %v81
    %v124 = vunpack.c.l.b16 %v82
    %v125 = vunpack.c.l.b16 %v83
    %v126 = vunpack.c.l.b16 %v84
    %v127 = vunpack.c.l.b16 %v85
    %v128 = vunpack.c.l.b16 %v86
    %v129 = vunpack.c.l.b16 %v87
    %v130 = vunpack.c.l.b16 %v88
    %v131 = vunpack.c.l.b16 %v89
    %v132 = vunpack.c.l.b16 %v90
    %v133 = vunpack.c.l.b16 %v91
    %v134 = vunpack.c.l.b16 %v92
    %v135 = vunpack.c.l.b16 %v93
    %v136 = vpack.c.b16 %v121, %v120
    %v137 = vpack.c.b16 %v123, %v122
    %v138 = vpack.c.b16 %v125, %v124
    %v139 = vpack.c.b16 %v127, %v126
    %v140 = vpack.c.b16 %v129, %v128
    %v141 = vpack.c.b16 %v131, %v130
    %v142 = vpack.c.b16 %v133, %v132
    %v143 = vpack.c.b16 %v135, %v134
    %152 = vmatpush.bf16.msra.mxu0 %v143
    %153 = vmatpush.bf16.msra.mxu0 %v142
    %154 = vmatpush.bf16.msra.mxu0 %v141
    %155 = vmatpush.bf16.msra.mxu0 %v140
    %156 = vmatpush.bf16.msra.mxu0 %v139
    %157 = vmatpush.bf16.msra.mxu0 %v138
    %158 = vmatpush.bf16.msra.mxu0 %v137
    %159 = vmatpush.bf16.msra.mxu0 %v136
    %160 = vmatmul.bf16.gmra.mxu0 %v102
    %v161 = vpop.f32.mrf.mxu0
    %v162 = vadd.f32 %v96, %v161
    %v163 = vpop.f32.mrf.mxu0
    %v164 = vadd.f32 %v96, %v163
    %165 = vdwg.mxu0
    %166 = vadd.xlane.f32.xlu0 %v162
    %v167 = vpop.xlane.xlu0 %166
    %168 = vadd.xlane.f32.xlu0 %v164
    %v169 = vpop.xlane.xlu0 %168
    %v170 = vmul.f32 %v167, 0.03125
    %v171 = vmul.f32 %v169, 0.03125
    %v172 = vsub.f32 %v162, %v170
    %v173 = vsub.f32 %v164, %v171
    %v174 = vlaneseq
    %v175 = vand.u32 %v174, 127
    %vm176 = vcmp.lt.s32.totalorder %v175, 32
    %v177 = vsel %vm176, 1, 0
    %vm178 = vcmp.eq.s32.totalorder %v177, 1
    %v179 = vsel %vm178, %v172, 0.0
    %v180 = vsel %vm178, %v173, 0.0
    %v181 = vmul.f32 %v179, %v179
    %v182 = vmul.f32 %v180, %v180
    %183 = vadd.xlane.f32.xlu0 %v181
    %v184 = vpop.xlane.xlu0 %183
    %185 = vadd.xlane.f32.xlu0 %v182
    %v186 = vpop.xlane.xlu0 %185
    %v187 = vmul.f32 %v184, 0.03125
    %v188 = vmul.f32 %v186, 0.03125
    %v189 = vadd.f32 %v187, 1e-05
    %v190 = vadd.f32 %v188, 1e-05
    %v191 = vrsqrt.pop %v189
    %v192 = vmul.f32 %v191, %v189
    %v193 = vmul.f32 %v192, %v191
    %v194 = vmul.f32 0.5, %v193
    %v195 = vsub.f32 1.5, %v194
    %v196 = vmul.f32 %v191, %v195
    %vm197 = vweird.f32 %v189
    %vm198 = vweird.f32 %v191
    %vm199 = vmor %vm197, %vm198
    %v200 = vsel %vm199, %v191, %v196
    %v201 = vrsqrt.pop %v190
    %v202 = vmul.f32 %v201, %v190
    %v203 = vmul.f32 %v202, %v201
    %v204 = vmul.f32 0.5, %v203
    %v205 = vsub.f32 1.5, %v204
    %v206 = vmul.f32 %v201, %v205
    %vm207 = vweird.f32 %v190
    %vm208 = vweird.f32 %v201
    %vm209 = vmor %vm207, %vm208
    %v210 = vsel %vm209, %v201, %v206
    %v211 = vmul.f32 %v172, %v200
    %v212 = vmul.f32 %v173, %v210
    %v213 = vld [vmem:[%s3] sm:$0x1]
    %v215 = vperm.slane %v213, 0
    %v217 = vmul.f32 %v211, %v215
    %v218 = vmul.f32 %v212, %v215
    %v219 = vld [vmem:[%s4] sm:$0x1]
    %v221 = vperm.slane %v219, 0
    %v223 = vadd.f32 %v217, %v221
    %v224 = vadd.f32 %v218, %v221
    %v225 = vmax.f32 %v223, 0.0
    %v226 = vmax.f32 %v224, 0.0
    %v227 = vadd.f32 %v76, %v225
    %v228 = vadd.f32 %v77, %v226
    %v229 = vpack.c.bf16 %v228, %v227
    %v230 = vld [vmem:[#allocation7] sm:$0xf]
    %v231 = vld [vmem:[#allocation7 + $0x4] sm:$0xf]
    %v232 = vld [vmem:[#allocation7 + $0x8] sm:$0xf]
    %v233 = vld [vmem:[#allocation7 + $0xc] sm:$0xf]
    %v234 = vld [vmem:[#allocation7 + $0x10] sm:$0xf]
    %v235 = vld [vmem:[#allocation7 + $0x14] sm:$0xf]
    %v236 = vld [vmem:[#allocation7 + $0x18] sm:$0xf]
    %v237 = vld [vmem:[#allocation7 + $0x1c] sm:$0xf]
    %v238 = vld [vmem:[#allocation7 + $0x20] sm:$0xf]
    %v239 = vld [vmem:[#allocation7 + $0x24] sm:$0xf]
    %v240 = vld [vmem:[#allocation7 + $0x28] sm:$0xf]
    %v241 = vld [vmem:[#allocation7 + $0x2c] sm:$0xf]
    %v242 = vld [vmem:[#allocation7 + $0x30] sm:$0xf]
    %v243 = vld [vmem:[#allocation7 + $0x34] sm:$0xf]
    %v244 = vld [vmem:[#allocation7 + $0x38] sm:$0xf]
    %v245 = vld [vmem:[#allocation7 + $0x3c] sm:$0xf]
    %v246 = vld [vmem:[%s6] sm:$0x1]
    %v248 = vperm.slane %v246, 0
    %v266 = vunpack.c.l.b16 %v230
    %v267 = vunpack.c.l.b16 %v231
    %v268 = vunpack.c.l.b16 %v232
    %v269 = vunpack.c.l.b16 %v233
    %v270 = vunpack.c.l.b16 %v234
    %v271 = vunpack.c.l.b16 %v235
    %v272 = vunpack.c.l.b16 %v236
    %v273 = vunpack.c.l.b16 %v237
    %v274 = vunpack.c.l.b16 %v238
    %v275 = vunpack.c.l.b16 %v239
    %v276 = vunpack.c.l.b16 %v240
    %v277 = vunpack.c.l.b16 %v241
    %v278 = vunpack.c.l.b16 %v242
    %v279 = vunpack.c.l.b16 %v243
    %v280 = vunpack.c.l.b16 %v244
    %v281 = vunpack.c.l.b16 %v245
    %v282 = vpack.c.b16 %v267, %v266
    %v283 = vpack.c.b16 %v269, %v268
    %v284 = vpack.c.b16 %v271, %v270
    %v285 = vpack.c.b16 %v273, %v272
    %v286 = vpack.c.b16 %v275, %v274
    %v287 = vpack.c.b16 %v277, %v276
    %v288 = vpack.c.b16 %v279, %v278
    %v289 = vpack.c.b16 %v281, %v280
    %298 = vmatpush.bf16.msra.mxu0 %v289
    %299 = vmatpush.bf16.msra.mxu0 %v288
    %300 = vmatpush.bf16.msra.mxu0 %v287
    %301 = vmatpush.bf16.msra.mxu0 %v286
    %302 = vmatpush.bf16.msra.mxu0 %v285
    %303 = vmatpush.bf16.msra.mxu0 %v284
    %304 = vmatpush.bf16.msra.mxu0 %v283
    %305 = vmatpush.bf16.msra.mxu0 %v282
    %306 = vmatmul.bf16.gmra.mxu0 %v229
    %v307 = vpop.f32.mrf.mxu0
    %v308 = vadd.f32 %v248, %v307
    %v309 = vpop.f32.mrf.mxu0
    %v310 = vadd.f32 %v248, %v309
    %311 = vdwg.mxu0
    %312 = vst [vmem:[#allocation8] sm:$0xff] %v308
    %313 = vst [vmem:[#allocation8 + $0x8] sm:$0xff] %v310
    // Predicated region
    $region42: #{_decoder_res_run.1} parent=1 // pred_check
      _
    $region43: #{_decoder_res_run.1} parent=1 // pred_check_branch
      %315 = sbr.rel (0) target = $region45
    $region44: #{_decoder_res_run.1} parent=1 // pred_region
      %317 = vsyncadd [#allocation4], 0
      %s318 = sshll.u32 [#allocation8], 4
      %s319 = int_to_ptr.vmem [resolvable:$true] %s318
      %s320 = sshll.u32 %s7, 4
      %s321 = int_to_ptr.hbm [resolvable:$true] %s320
      %326 = dma.vmem_to_hbm [thread:$0]  %s319, 256, %s321, [#allocation4], 128, 128, 8
    $region45: #{_decoder_res_run.1} parent=1 // pred_fallthru
      _
    // Predicated region
    $region46: #{_decoder_res_run.1} parent=1 // pred_check
      _
    $region47: #{_decoder_res_run.1} parent=1 // pred_check_branch
      %328 = sbr.rel (0) target = $region49
    $region48: #{_decoder_res_run.1} parent=1 // pred_region
      %330 = dma.done [#allocation4], 256
    $region49: #{_decoder_res_run.1} parent=1 // pred_fallthru
      _
    %331 = vsyncpa [#allocation3], 1
    %332 = vsyncpa [#allocation6], 1
    %333 = vsyncpa [#allocation4], 1

// kernel: _decoder_res_run.1
$region0: #{_decoder_res_run.1}
  #allocation0 [shape = 'u32[]', space=smem, size = 0x4, offset = 0x4, fixed_abs, tag = 'smem constant byte address 0x4 - core index']
  #allocation1 [shape = 'u32[72,128]{1,0:T(1,128)}', space=vmem, size = 0x9000, scoped, tag = 'internal scratch']
  %s0 = inlined_call_operand.hbm [shape: bf16[16,128], index: 0, kind: input, shape index: {}]
  %s1 = inlined_call_operand.hbm [shape: bf16[128,128], index: 1, kind: input, shape index: {}]
  %s2 = inlined_call_operand.vmem [shape: f32[1,128], index: 2, kind: input, shape index: {}]
  %s3 = inlined_call_operand.vmem [shape: f32[1,128], index: 3, kind: input, shape index: {}]
  %s4 = inlined_call_operand.vmem [shape: f32[1,128], index: 4, kind: input, shape index: {}]
  %s5 = inlined_call_operand.hbm [shape: bf16[128,128], index: 5, kind: input, shape index: {}]
  %s6 = inlined_call_operand.vmem [shape: f32[1,128], index: 6, kind: input, shape index: {}]
  %s7 = inlined_call_operand.hbm [shape: f32[16,128], index: 7, kind: output, shape index: {}]
  %s8 = sld [smem:[#allocation0]]
  $region50: #{_decoder_res_run.1} parent=0
    _
  %s10 = ssub.s32 1, %s8
  %s11 = scalar_select 0, %s10, %s8
  $region1: #{_decoder_res_run.1} parent=0
    #allocation2 [shape = 'u8[4096]{0}', space=vmem, size = 0x1000, scoped, tag = 'input window, operand 0, single buffered']
    #allocation3 [shape = 's32[1]{0}', space=sflag, size = 0x4, scoped, tag = 'scoped memory for _decoder_res_run.1']
    #allocation4 [shape = 's32[1]{0}', space=sflag, size = 0x4, scoped, tag = 'scoped memory for _decoder_res_run.1']
    #allocation5 [shape = 'u8[32768]{0}', space=vmem, size = 0x8000, scoped, tag = 'input window, operand 1, single buffered']
    #allocation6 [shape = 's32[1]{0}', space=sflag, size = 0x4, scoped, tag = 'scoped memory for _decoder_res_run.1']
    #allocation7 [shape = 'u8[32768]{0}', space=vmem, size = 0x8000, scoped, tag = 'input window, operand 5, single buffered']
    #allocation8 [shape = 'u8[8192]{0}', space=vmem, size = 0x2000, scoped, tag = 'output window, operand 0, single buffered']
    %12 = vsyncpa [#allocation3], 0
    %13 = vsyncpa [#allocation6], 0
    %14 = vsyncpa [#allocation4], 0
    // Predicated region
    $region2: #{_decoder_res_run.1} parent=1 // pred_check
      _
    $region3: #{_decoder_res_run.1} parent=1 // pred_check_branch
      %16 = sbr.rel (0) target = $region5
    $region4: #{_decoder_res_run.1} parent=1 // pred_region
      %18 = vsyncadd [#allocation3], 0
      %s19 = sshll.u32 %s0, 4
      %s20 = int_to_ptr.hbm [resolvable:$true] %s19
      %s21 = sshll.u32 [#allocation2], 4
      %s22 = int_to_ptr.vmem [resolvable:$true] %s21
      %27 = dma.hbm_to_vmem [thread:$0]  %s20, 128, %s22, [#allocation3], 64, 64, 4
    $region5: #{_decoder_res_run.1} parent=1 // pred_fallthru
      _
    // Predicated region
    $region6: #{_decoder_res_run.1} parent=1 // pred_check
      _
    $region7: #{_decoder_res_run.1} parent=1 // pred_check_branch
      %29 = sbr.rel (0) target = $region9
    $region8: #{_decoder_res_run.1} parent=1 // pred_region
      %31 = vsyncadd [#allocation6], 0
      %s32 = sshll.u32 %s1, 4
      %s33 = int_to_ptr.hbm [resolvable:$true] %s32
      %s34 = sshll.u32 [#allocation5], 4
      %s35 = int_to_ptr.vmem [resolvable:$true] %s34
      %40 = dma.hbm_to_vmem [thread:$0]  %s33, 1024, %s35, [#allocation6], 64, 64, 4
    $region9: #{_decoder_res_run.1} parent=1 // pred_fallthru
      _
    // Predicated region
    $region10: #{_decoder_res_run.1} parent=1 // pred_check
      _
    $region11: #{_decoder_res_run.1} parent=1 // pred_check_branch
      %42 = sbr.rel (0) target = $region13
    $region12: #{_decoder_res_run.1} parent=1 // pred_region
      _
    $region13: #{_decoder_res_run.1} parent=1 // pred_fallthru
      _
    // Predicated region
    $region14: #{_decoder_res_run.1} parent=1 // pred_check
      _
    $region15: #{_decoder_res_run.1} parent=1 // pred_check_branch
      %44 = sbr.rel (0) target = $region17
    $region16: #{_decoder_res_run.1} parent=1 // pred_region
      _
    $region17: #{_decoder_res_run.1} parent=1 // pred_fallthru
      _
    // Predicated region
    $region18: #{_decoder_res_run.1} parent=1 // pred_check
      _
    $region19: #{_decoder_res_run.1} parent=1 // pred_check_branch
      %46 = sbr.rel (0) target = $region21
    $region20: #{_decoder_res_run.1} parent=1 // pred_region
      _
    $region21: #{_decoder_res_run.1} parent=1 // pred_fallthru
      _
    // Predicated region
    $region22: #{_decoder_res_run.1} parent=1 // pred_check
      _
    $region23: #{_decoder_res_run.1} parent=1 // pred_check_branch
      %48 = sbr.rel (0) target = $region25
    $region24: #{_decoder_res_run.1} parent=1 // pred_region
      %50 = vsyncadd [#allocation6], 0
      %s51 = sshll.u32 %s5, 4
      %s52 = int_to_ptr.hbm [resolvable:$true] %s51
      %s53 = sshll.u32 [#allocation7], 4
      %s54 = int_to_ptr.vmem [resolvable:$true] %s53
      %59 = dma.hbm_to_vmem [thread:$0]  %s52, 1024, %s54, [#allocation6], 64, 64, 4
    $region25: #{_decoder_res_run.1} parent=1 // pred_fallthru
      _
    // Predicated region
    $region26: #{_decoder_res_run.1} parent=1 // pred_check
      _
    $region27: #{_decoder_res_run.1} parent=1 // pred_check_branch
      %61 = sbr.rel (0) target = $region29
    $region28: #{_decoder_res_run.1} parent=1 // pred_region
      _
    $region29: #{_decoder_res_run.1} parent=1 // pred_fallthru
      _
    // Predicated region
    $region30: #{_decoder_res_run.1} parent=1 // pred_check
      _
    $region31: #{_decoder_res_run.1} parent=1 // pred_check_branch
      %63 = sbr.rel (0) target = $region33
    $region32: #{_decoder_res_run.1} parent=1 // pred_region
      %65 = dma.done [#allocation3], 128
    $region33: #{_decoder_res_run.1} parent=1 // pred_fallthru
      _
    // Predicated region
    $region34: #{_decoder_res_run.1} parent=1 // pred_check
      _
    $region35: #{_decoder_res_run.1} parent=1 // pred_check_branch
      %67 = sbr.rel (0) target = $region37
    $region36: #{_decoder_res_run.1} parent=1 // pred_region
      %69 = dma.done [#allocation6], 1024
    $region37: #{_decoder_res_run.1} parent=1 // pred_fallthru
      _
    // Predicated region
    $region38: #{_decoder_res_run.1} parent=1 // pred_check
      _
    $region39: #{_decoder_res_run.1} parent=1 // pred_check_branch
      %71 = sbr.rel (0) target = $region41
    $region40: #{_decoder_res_run.1} parent=1 // pred_region
      %73 = dma.done [#allocation6], 1024
    $region41: #{_decoder_res_run.1} parent=1 // pred_fallthru
      _
    %v74 = vld [vmem:[#allocation2] sm:$0xf]
    %v75 = vld [vmem:[#allocation2 + $0x4] sm:$0xf]
    %v76 = vunpack.c.l.bf16 %v74
    %v77 = vunpack.c.l.bf16 %v75
    %v78 = vld [vmem:[#allocation5] sm:$0xf]
    %v79 = vld [vmem:[#allocation5 + $0x4] sm:$0xf]
    %v80 = vld [vmem:[#allocation5 + $0x8] sm:$0xf]
    %v81 = vld [vmem:[#allocation5 + $0xc] sm:$0xf]
    %v82 = vld [vmem:[#allocation5 + $0x10] sm:$0xf]
    %v83 = vld [vmem:[#allocation5 + $0x14] sm:$0xf]
    %v84 = vld [vmem:[#allocation5 + $0x18] sm:$0xf]
    %v85 = vld [vmem:[#allocation5 + $0x1c] sm:$0xf]
    %v86 = vld [vmem:[#allocation5 + $0x20] sm:$0xf]
    %v87 = vld [vmem:[#allocation5 + $0x24] sm:$0xf]
    %v88 = vld [vmem:[#allocation5 + $0x28] sm:$0xf]
    %v89 = vld [vmem:[#allocation5 + $0x2c] sm:$0xf]
    %v90 = vld [vmem:[#allocation5 + $0x30] sm:$0xf]
    %v91 = vld [vmem:[#allocation5 + $0x34] sm:$0xf]
    %v92 = vld [vmem:[#allocation5 + $0x38] sm:$0xf]
    %v93 = vld [vmem:[#allocation5 + $0x3c] sm:$0xf]
    %v94 = vld [vmem:[%s2] sm:$0x1]
    %v96 = vperm.slane %v94, 0
    %v100 = vunpack.c.l.b16 %v74
    %v101 = vunpack.c.l.b16 %v75
    %v102 = vpack.c.b16 %v101, %v100
    %v120 = vunpack.c.l.b16 %v78
    %v121 = vunpack.c.l.b16 %v79
    %v122 = vunpack.c.l.b16 %v80
    %v123 = vunpack.c.l.b16 %v81
    %v124 = vunpack.c.l.b16 %v82
    %v125 = vunpack.c.l.b16 %v83
    %v126 = vunpack.c.l.b16 %v84
    %v127 = vunpack.c.l.b16 %v85
    %v128 = vunpack.c.l.b16 %v86
    %v129 = vunpack.c.l.b16 %v87
    %v130 = vunpack.c.l.b16 %v88
    %v131 = vunpack.c.l.b16 %v89
    %v132 = vunpack.c.l.b16 %v90
    %v133 = vunpack.c.l.b16 %v91
    %v134 = vunpack.c.l.b16 %v92
    %v135 = vunpack.c.l.b16 %v93
    %v136 = vpack.c.b16 %v121, %v120
    %v137 = vpack.c.b16 %v123, %v122
    %v138 = vpack.c.b16 %v125, %v124
    %v139 = vpack.c.b16 %v127, %v126
    %v140 = vpack.c.b16 %v129, %v128
    %v141 = vpack.c.b16 %v131, %v130
    %v142 = vpack.c.b16 %v133, %v132
    %v143 = vpack.c.b16 %v135, %v134
    %152 = vmatpush.bf16.msra.mxu0 %v143
    %153 = vmatpush.bf16.msra.mxu0 %v142
    %154 = vmatpush.bf16.msra.mxu0 %v141
    %155 = vmatpush.bf16.msra.mxu0 %v140
    %156 = vmatpush.bf16.msra.mxu0 %v139
    %157 = vmatpush.bf16.msra.mxu0 %v138
    %158 = vmatpush.bf16.msra.mxu0 %v137
    %159 = vmatpush.bf16.msra.mxu0 %v136
    %160 = vmatmul.bf16.gmra.mxu0 %v102
    %v161 = vpop.f32.mrf.mxu0
    %v162 = vadd.f32 %v96, %v161
    %v163 = vpop.f32.mrf.mxu0
    %v164 = vadd.f32 %v96, %v163
    %165 = vdwg.mxu0
    %166 = vadd.xlane.f32.xlu0 %v162
    %v167 = vpop.xlane.xlu0 %166
    %168 = vadd.xlane.f32.xlu0 %v164
    %v169 = vpop.xlane.xlu0 %168
    %v170 = vmul.f32 %v167, 0.03125
    %v171 = vmul.f32 %v169, 0.03125
    %v172 = vsub.f32 %v162, %v170
    %v173 = vsub.f32 %v164, %v171
    %v174 = vlaneseq
    %v175 = vand.u32 %v174, 127
    %vm176 = vcmp.lt.s32.totalorder %v175, 32
    %v177 = vsel %vm176, 1, 0
    %vm178 = vcmp.eq.s32.totalorder %v177, 1
    %v179 = vsel %vm178, %v172, 0.0
    %v180 = vsel %vm178, %v173, 0.0
    %v181 = vmul.f32 %v179, %v179
    %v182 = vmul.f32 %v180, %v180
    %183 = vadd.xlane.f32.xlu0 %v181
    %v184 = vpop.xlane.xlu0 %183
    %185 = vadd.xlane.f32.xlu0 %v182
    %v186 = vpop.xlane.xlu0 %185
    %v187 = vmul.f32 %v184, 0.03125
    %v188 = vmul.f32 %v186, 0.03125
    %v189 = vadd.f32 %v187, 1e-05
    %v190 = vadd.f32 %v188, 1e-05
    %v191 = vrsqrt.pop %v189
    %v192 = vmul.f32 %v191, %v189
    %v193 = vmul.f32 %v192, %v191
    %v194 = vmul.f32 0.5, %v193
    %v195 = vsub.f32 1.5, %v194
    %v196 = vmul.f32 %v191, %v195
    %vm197 = vweird.f32 %v189
    %vm198 = vweird.f32 %v191
    %vm199 = vmor %vm197, %vm198
    %v200 = vsel %vm199, %v191, %v196
    %v201 = vrsqrt.pop %v190
    %v202 = vmul.f32 %v201, %v190
    %v203 = vmul.f32 %v202, %v201
    %v204 = vmul.f32 0.5, %v203
    %v205 = vsub.f32 1.5, %v204
    %v206 = vmul.f32 %v201, %v205
    %vm207 = vweird.f32 %v190
    %vm208 = vweird.f32 %v201
    %vm209 = vmor %vm207, %vm208
    %v210 = vsel %vm209, %v201, %v206
    %v211 = vmul.f32 %v172, %v200
    %v212 = vmul.f32 %v173, %v210
    %v213 = vld [vmem:[%s3] sm:$0x1]
    %v215 = vperm.slane %v213, 0
    %v217 = vmul.f32 %v211, %v215
    %v218 = vmul.f32 %v212, %v215
    %v219 = vld [vmem:[%s4] sm:$0x1]
    %v221 = vperm.slane %v219, 0
    %v223 = vadd.f32 %v217, %v221
    %v224 = vadd.f32 %v218, %v221
    %v225 = vmax.f32 %v223, 0.0
    %v226 = vmax.f32 %v224, 0.0
    %v227 = vadd.f32 %v76, %v225
    %v228 = vadd.f32 %v77, %v226
    %v229 = vpack.c.bf16 %v228, %v227
    %v230 = vld [vmem:[#allocation7] sm:$0xf]
    %v231 = vld [vmem:[#allocation7 + $0x4] sm:$0xf]
    %v232 = vld [vmem:[#allocation7 + $0x8] sm:$0xf]
    %v233 = vld [vmem:[#allocation7 + $0xc] sm:$0xf]
    %v234 = vld [vmem:[#allocation7 + $0x10] sm:$0xf]
    %v235 = vld [vmem:[#allocation7 + $0x14] sm:$0xf]
    %v236 = vld [vmem:[#allocation7 + $0x18] sm:$0xf]
    %v237 = vld [vmem:[#allocation7 + $0x1c] sm:$0xf]
    %v238 = vld [vmem:[#allocation7 + $0x20] sm:$0xf]
    %v239 = vld [vmem:[#allocation7 + $0x24] sm:$0xf]
    %v240 = vld [vmem:[#allocation7 + $0x28] sm:$0xf]
    %v241 = vld [vmem:[#allocation7 + $0x2c] sm:$0xf]
    %v242 = vld [vmem:[#allocation7 + $0x30] sm:$0xf]
    %v243 = vld [vmem:[#allocation7 + $0x34] sm:$0xf]
    %v244 = vld [vmem:[#allocation7 + $0x38] sm:$0xf]
    %v245 = vld [vmem:[#allocation7 + $0x3c] sm:$0xf]
    %v246 = vld [vmem:[%s6] sm:$0x1]
    %v248 = vperm.slane %v246, 0
    %v266 = vunpack.c.l.b16 %v230
    %v267 = vunpack.c.l.b16 %v231
    %v268 = vunpack.c.l.b16 %v232
    %v269 = vunpack.c.l.b16 %v233
    %v270 = vunpack.c.l.b16 %v234
    %v271 = vunpack.c.l.b16 %v235
    %v272 = vunpack.c.l.b16 %v236
    %v273 = vunpack.c.l.b16 %v237
    %v274 = vunpack.c.l.b16 %v238
    %v275 = vunpack.c.l.b16 %v239
    %v276 = vunpack.c.l.b16 %v240
    %v277 = vunpack.c.l.b16 %v241
    %v278 = vunpack.c.l.b16 %v242
    %v279 = vunpack.c.l.b16 %v243
    %v280 = vunpack.c.l.b16 %v244
    %v281 = vunpack.c.l.b16 %v245
    %v282 = vpack.c.b16 %v267, %v266
    %v283 = vpack.c.b16 %v269, %v268
    %v284 = vpack.c.b16 %v271, %v270
    %v285 = vpack.c.b16 %v273, %v272
    %v286 = vpack.c.b16 %v275, %v274
    %v287 = vpack.c.b16 %v277, %v276
    %v288 = vpack.c.b16 %v279, %v278
    %v289 = vpack.c.b16 %v281, %v280
    %298 = vmatpush.bf16.msra.mxu0 %v289
    %299 = vmatpush.bf16.msra.mxu0 %v288
    %300 = vmatpush.bf16.msra.mxu0 %v287
    %301 = vmatpush.bf16.msra.mxu0 %v286
    %302 = vmatpush.bf16.msra.mxu0 %v285
    %303 = vmatpush.bf16.msra.mxu0 %v284
    %304 = vmatpush.bf16.msra.mxu0 %v283
    %305 = vmatpush.bf16.msra.mxu0 %v282
    %306 = vmatmul.bf16.gmra.mxu0 %v229
    %v307 = vpop.f32.mrf.mxu0
    %v308 = vadd.f32 %v248, %v307
    %v309 = vpop.f32.mrf.mxu0
    %v310 = vadd.f32 %v248, %v309
    %311 = vdwg.mxu0
    %312 = vst [vmem:[#allocation8] sm:$0xff] %v308
    %313 = vst [vmem:[#allocation8 + $0x8] sm:$0xff] %v310
    // Predicated region
    $region42: #{_decoder_res_run.1} parent=1 // pred_check
      _
    $region43: #{_decoder_res_run.1} parent=1 // pred_check_branch
      %315 = sbr.rel (0) target = $region45
    $region44: #{_decoder_res_run.1} parent=1 // pred_region
      %317 = vsyncadd [#allocation4], 0
      %s318 = sshll.u32 [#allocation8], 4
      %s319 = int_to_ptr.vmem [resolvable:$true] %s318
      %s320 = sshll.u32 %s7, 4
      %s321 = int_to_ptr.hbm [resolvable:$true] %s320
      %326 = dma.vmem_to_hbm [thread:$0]  %s319, 256, %s321, [#allocation4], 128, 128, 8
    $region45: #{_decoder_res_run.1} parent=1 // pred_fallthru
      _
    // Predicated region
    $region46: #{_decoder_res_run.1} parent=1 // pred_check
      _
    $region47: #{_decoder_res_run.1} parent=1 // pred_check_branch
      %328 = sbr.rel (0) target = $region49
    $region48: #{_decoder_res_run.1} parent=1 // pred_region
      %330 = dma.done [#allocation4], 256
    $region49: #{_decoder_res_run.1} parent=1 // pred_fallthru
      _
    %331 = vsyncpa [#allocation3], 1
    %332 = vsyncpa [#allocation6], 1
    %333 = vsyncpa [#allocation4], 1

</llo_original>
